<compile_context>
chip_gen: v6e
topology: v6e:2x2x1
jax: 0.10.0
libtpu: 0.0.40
codegen_flags: <defaults>
</compile_context>

<pallas_src>
import functools

import numpy as np
import jax
import jax.numpy as jnp
from jax.experimental import pallas as pl
from jax.experimental.pallas import tpu as pltpu


def attn_kernel(x_ref, wqkv_ref, bqkv_ref, wo_ref, bo_ref, gamma_ref, beta_ref,
                o_ref, *, n_heads, d_k, ln_eps, mm_dtype):
    tb, s, d = x_ref.shape
    hdk = n_heads * d_k
    n = tb * s

    x = x_ref[...]                       # (TB, S, D) f32 (kept for residual/LN)
    x2 = x.reshape(n, d)                 # flatten rows -> fill MXU M dimension

    # Fused Q|K|V projection: one wide MXU matmul over all TB*S rows.
    qkv = jnp.dot(x2.astype(mm_dtype), wqkv_ref[...],
                  preferred_element_type=jnp.float32) + bqkv_ref[...]   # (N, 3*Hdk)

    scale = float(1.0 / np.sqrt(d_k))
    head_outs = []
    # Static loop over heads (H is small/static); each contraction is batched
    # over TB and contracts the last dims directly (no kh.T / XLU transpose).
    # TODO(synk): for production sizes (large S) this would become an
    # online-softmax (flash) loop over KV tiles instead of a full (S, S) score.
    for h in range(n_heads):
        qh = qkv[:, h * d_k:(h + 1) * d_k].reshape(tb, s, d_k)
        kh = qkv[:, hdk + h * d_k: hdk + (h + 1) * d_k].reshape(tb, s, d_k)
        vh = qkv[:, 2 * hdk + h * d_k: 2 * hdk + (h + 1) * d_k].reshape(tb, s, d_k)

        sc = jnp.einsum('bqd,bkd->bqk', qh.astype(mm_dtype), kh.astype(mm_dtype),
                        preferred_element_type=jnp.float32) * scale     # (TB,S,S)
        sc = sc - jnp.max(sc, axis=-1, keepdims=True)
        p = jnp.exp(sc)
        # EUP reciprocal instead of a VALU divide for the softmax normalization.
        p = p * pl.reciprocal(jnp.sum(p, axis=-1, keepdims=True), approx=True)
        # TODO(synk): dropout(p=0.5) on attention weights is identity in eval mode.
        head_outs.append(
            jnp.einsum('bqk,bkd->bqd', p.astype(mm_dtype), vh.astype(mm_dtype),
                       preferred_element_type=jnp.float32))             # (TB,S,dk)

    concat = jnp.concatenate(head_outs, axis=-1).reshape(n, hdk)        # (N, Hdk)

    # Output projection + residual + LayerNorm (f32).
    out = jnp.dot(concat.astype(mm_dtype), wo_ref[...],
                  preferred_element_type=jnp.float32) + bo_ref[...]     # (N, D)
    y = x2 + out
    mean = jnp.mean(y, axis=-1, keepdims=True)
    var = jnp.mean((y - mean) ** 2, axis=-1, keepdims=True)
    yn = (y - mean) * jax.lax.rsqrt(var + ln_eps)
    res = yn * gamma_ref[...] + beta_ref[...]
    o_ref[...] = res.reshape(tb, s, d).astype(o_ref.dtype)


def _pick_batch_tile(B, S, rows_target=256):
    """Batch-tile size: ~rows_target rows per step, but keep >=2 grid steps
    (v7x has 2 TensorCores) and exact divisibility of B."""
    tb = max(1, min(B, rows_target // max(S, 1)))
    while tb > 1 and (B % tb != 0 or B // tb < 2):
        tb -= 1
    return tb


def improved_self_attention(x, params, *, n_heads, d_k, ln_eps=1e-5,
                            mm_dtype=jnp.bfloat16):
    """x: (B, S, d_model) or (B, d_model) float32. Mirrors the PyTorch forward."""
    squeeze_in = x.ndim == 2
    if squeeze_in:
        x = x[:, None, :]
    B, S, D = x.shape
    Hdk = n_heads * d_k

    # Fuse W_q|W_k|W_v (and biases) host-side -> one (D, 3*Hdk) matmul operand.
    wqkv = jnp.concatenate([params["wq"], params["wk"], params["wv"]],
                           axis=1).astype(mm_dtype)
    bqkv = jnp.concatenate([params["bq"], params["bk"], params["bv"]],
                           axis=1).astype(jnp.float32)
    wo = params["wo"].astype(mm_dtype)

    TB = _pick_batch_tile(B, S)
    grid = (B // TB,)

    kernel = functools.partial(attn_kernel, n_heads=n_heads, d_k=d_k,
                               ln_eps=ln_eps, mm_dtype=mm_dtype)

    rep2d = lambda shape: pl.BlockSpec(shape, lambda b: (0, 0))
    in_specs = [
        pl.BlockSpec((TB, S, D), lambda b: (b, 0, 0)),   # x tile
        rep2d((D, 3 * Hdk)),                             # fused W_qkv (bf16)
        rep2d((1, 3 * Hdk)),                             # fused b_qkv (f32)
        rep2d((Hdk, D)),                                 # W_o (bf16)
        rep2d((1, D)),                                   # b_o
        rep2d((1, D)),                                   # gamma
        rep2d((1, D)),                                   # beta
    ]
    out_spec = pl.BlockSpec((TB, S, D), lambda b: (b, 0, 0))

    out = pl.pallas_call(
        kernel,
        out_shape=jax.ShapeDtypeStruct((B, S, D), x.dtype),
        grid_spec=pltpu.PrefetchScalarGridSpec(
            num_scalar_prefetch=0,
            grid=grid,
            in_specs=in_specs,
            out_specs=out_spec,
        ),
        compiler_params=pltpu.CompilerParams(
            dimension_semantics=("parallel",),
            vmem_limit_bytes=32 * 1024 * 1024,
        ),
    )(x, wqkv, bqkv, wo, params["bo"], params["gamma"], params["beta"])

    if squeeze_in or S == 1:              # mirrors PyTorch .squeeze(1)
        out = out[:, 0, :]
    return out


def reference(x, params, *, n_heads, d_k, ln_eps=1e-5):
    B, S, D = x.shape
    q = (x @ params["wq"] + params["bq"]).reshape(B, S, n_heads, d_k).transpose(0, 2, 1, 3)
    k = (x @ params["wk"] + params["bk"]).reshape(B, S, n_heads, d_k).transpose(0, 2, 1, 3)
    v = (x @ params["wv"] + params["bv"]).reshape(B, S, n_heads, d_k).transpose(0, 2, 1, 3)
    s = jnp.einsum("bhqd,bhkd->bhqk", q, k) / np.sqrt(d_k)
    p = jax.nn.softmax(s, axis=-1)
    o = jnp.einsum("bhqk,bhkd->bhqd", p, v).transpose(0, 2, 1, 3).reshape(B, S, -1)
    o = o @ params["wo"] + params["bo"]
    y = x + o
    mean = jnp.mean(y, axis=-1, keepdims=True)
    var = jnp.mean((y - mean) ** 2, axis=-1, keepdims=True)
    return (y - mean) / jnp.sqrt(var + ln_eps) * params["gamma"] + params["beta"]


def init_params(key, d_model, d_k, n_heads):
    Hdk = d_k * n_heads
    ks = jax.random.split(key, 8)
    scale = 0.02
    return {
        "wq": scale * jax.random.normal(ks[0], (d_model, Hdk), jnp.float32),
        "bq": scale * jax.random.normal(ks[1], (1, Hdk), jnp.float32),
        "wk": scale * jax.random.normal(ks[2], (d_model, Hdk), jnp.float32),
        "bk": scale * jax.random.normal(ks[3], (1, Hdk), jnp.float32),
        "wv": scale * jax.random.normal(ks[4], (d_model, Hdk), jnp.float32),
        "bv": scale * jax.random.normal(ks[5], (1, Hdk), jnp.float32),
        "wo": scale * jax.random.normal(ks[6], (Hdk, d_model), jnp.float32),
        "bo": scale * jax.random.normal(ks[7], (1, d_model), jnp.float32),
        "gamma": jnp.ones((1, d_model), jnp.float32),
        "beta": jnp.zeros((1, d_model), jnp.float32),
    }


if __name__ == "__main__":
    B, S, d_model, d_k, n_heads = 2, 8, 32, 8, 4

    key = jax.random.PRNGKey(0)
    kx, kp = jax.random.split(key)
    x = jax.random.normal(kx, (B, S, d_model), jnp.float32)
    params = init_params(kp, d_model, d_k, n_heads)

    out = improved_self_attention(x, params, n_heads=n_heads, d_k=d_k)
    out = jax.block_until_ready(out)

    ref = reference(x, params, n_heads=n_heads, d_k=d_k)
    assert out.shape == (B, S, d_model)
    # bf16 matmul operands (f32 accumulation) -> loosened tolerance vs f32 ref.
    np.testing.assert_allclose(np.asarray(out), np.asarray(ref), rtol=2e-2, atol=2e-2)

    print("KERNEL_OK")
</pallas_src>

<mosaic_0001>
module attributes {stable_mosaic.version = 11 : i64} {
  func.func @attn_kernel(%arg0: i32, %arg1: memref<1x8x32xf32, #tpu.memory_space<vmem>>, %arg2: memref<32x96xbf16, #tpu.memory_space<vmem>>, %arg3: memref<1x96xf32, #tpu.memory_space<vmem>>, %arg4: memref<32x32xbf16, #tpu.memory_space<vmem>>, %arg5: memref<1x32xf32, #tpu.memory_space<vmem>>, %arg6: memref<1x32xf32, #tpu.memory_space<vmem>>, %arg7: memref<1x32xf32, #tpu.memory_space<vmem>>, %arg8: memref<1x8x32xf32, #tpu.memory_space<vmem>>) attributes {dimension_semantics = [#tpu.dimension_semantics<parallel>], iteration_bounds = array<i64: 2>, scalar_prefetch = 0 : i64, scratch_operands = 0 : i64, tpu.core_type = #tpu.core_type<tc>, window_params = [{transform_indices = @transform_0, window_bounds = array<i64: 1, 8, 32>}, {pipeline_mode = #tpu.pipeline_mode<synchronous>, transform_indices = @transform_1, window_bounds = array<i64: 32, 96>}, {pipeline_mode = #tpu.pipeline_mode<synchronous>, transform_indices = @transform_2, window_bounds = array<i64: 1, 96>}, {pipeline_mode = #tpu.pipeline_mode<synchronous>, transform_indices = @transform_3, window_bounds = array<i64: 32, 32>}, {pipeline_mode = #tpu.pipeline_mode<synchronous>, transform_indices = @transform_4, window_bounds = array<i64: 1, 32>}, {pipeline_mode = #tpu.pipeline_mode<synchronous>, transform_indices = @transform_5, window_bounds = array<i64: 1, 32>}, {pipeline_mode = #tpu.pipeline_mode<synchronous>, transform_indices = @transform_6, window_bounds = array<i64: 1, 32>}, {transform_indices = @transform_7, window_bounds = array<i64: 1, 8, 32>}]} {
    %c0 = arith.constant 0 : index
    %c0_0 = arith.constant 0 : index
    %c0_1 = arith.constant 0 : index
    %0 = vector.load %arg1[%c0, %c0_0, %c0_1] : memref<1x8x32xf32, #tpu.memory_space<vmem>>, vector<1x8x32xf32>
    %1 = vector.shape_cast %0 : vector<1x8x32xf32> to vector<8x32xf32>
    %2 = arith.truncf %1 : vector<8x32xf32> to vector<8x32xbf16>
    %c0_2 = arith.constant 0 : index
    %c0_3 = arith.constant 0 : index
    %3 = vector.load %arg2[%c0_2, %c0_3] : memref<32x96xbf16, #tpu.memory_space<vmem>>, vector<32x96xbf16>
    %cst = arith.constant dense<0.000000e+00> : vector<8x96xf32>
    %4 = tpu.matmul %2, %3, %cst {dimension_numbers = #tpu.dot_dimension_numbers<[1], [0], [0], [1], [0, 0, 1, 1], [], []>} : vector<8x32xbf16>, vector<32x96xbf16>, vector<8x96xf32> -> vector<8x96xf32>
    %c0_4 = arith.constant 0 : index
    %c0_5 = arith.constant 0 : index
    %5 = vector.load %arg3[%c0_4, %c0_5] : memref<1x96xf32, #tpu.memory_space<vmem>>, vector<1x96xf32>
    %6 = vector.broadcast %5 : vector<1x96xf32> to vector<8x96xf32>
    %7 = arith.addf %4, %6 : vector<8x96xf32>
    %8 = vector.extract_strided_slice %7 {offsets = [0, 0], sizes = [8, 8], strides = [1, 1]} : vector<8x96xf32> to vector<8x8xf32>
    %9 = vector.shape_cast %8 : vector<8x8xf32> to vector<1x8x8xf32>
    %10 = vector.extract_strided_slice %7 {offsets = [0, 32], sizes = [8, 8], strides = [1, 1]} : vector<8x96xf32> to vector<8x8xf32>
    %11 = vector.shape_cast %10 : vector<8x8xf32> to vector<1x8x8xf32>
    %12 = vector.extract_strided_slice %7 {offsets = [0, 64], sizes = [8, 8], strides = [1, 1]} : vector<8x96xf32> to vector<8x8xf32>
    %13 = vector.shape_cast %12 : vector<8x8xf32> to vector<1x8x8xf32>
    %14 = arith.truncf %9 : vector<1x8x8xf32> to vector<1x8x8xbf16>
    %15 = arith.truncf %11 : vector<1x8x8xf32> to vector<1x8x8xbf16>
    "tpu.trace_start"() <{level = 10 : i32, message = "bqd,bkd->bqk"}> : () -> ()
    %cst_6 = arith.constant dense<0.000000e+00> : vector<1x8x8xf32>
    %16 = tpu.matmul %14, %15, %cst_6 {dimension_numbers = #tpu.dot_dimension_numbers<[2], [2], [1], [1], [0, 0, 0, 1, 1, 1], [0], [0]>} : vector<1x8x8xbf16>, vector<1x8x8xbf16>, vector<1x8x8xf32> -> vector<1x8x8xf32>
    "tpu.trace_stop"() : () -> ()
    %cst_7 = arith.constant 0.353553385 : f32
    %17 = vector.broadcast %cst_7 : f32 to vector<1x8x8xf32>
    %18 = arith.mulf %16, %17 : vector<1x8x8xf32>
    %cst_8 = arith.constant dense<0xFF800000> : vector<1x8xf32>
    %19 = vector.multi_reduction <maximumf>, %18, %cst_8 [2] : vector<1x8x8xf32> to vector<1x8xf32>
    %20 = vector.shape_cast %19 : vector<1x8xf32> to vector<1x8x1xf32>
    %21 = vector.broadcast %20 : vector<1x8x1xf32> to vector<1x8x8xf32>
    %22 = arith.subf %18, %21 : vector<1x8x8xf32>
    %23 = math.exp %22 : vector<1x8x8xf32>
    %cst_9 = arith.constant dense<0.000000e+00> : vector<1x8xf32>
    %24 = vector.multi_reduction <add>, %23, %cst_9 [2] : vector<1x8x8xf32> to vector<1x8xf32>
    %25 = vector.shape_cast %24 : vector<1x8xf32> to vector<1x8x1xf32>
    %26 = tpu.reciprocal %25 {approx = true} : vector<1x8x1xf32> -> vector<1x8x1xf32>
    %27 = vector.broadcast %26 : vector<1x8x1xf32> to vector<1x8x8xf32>
    %28 = arith.mulf %23, %27 : vector<1x8x8xf32>
    %29 = arith.truncf %28 : vector<1x8x8xf32> to vector<1x8x8xbf16>
    %30 = arith.truncf %13 : vector<1x8x8xf32> to vector<1x8x8xbf16>
    "tpu.trace_start"() <{level = 10 : i32, message = "bqk,bkd->bqd"}> : () -> ()
    %cst_10 = arith.constant dense<0.000000e+00> : vector<1x8x8xf32>
    %31 = tpu.matmul %29, %30, %cst_10 {dimension_numbers = #tpu.dot_dimension_numbers<[2], [1], [1], [2], [0, 0, 0, 1, 1, 2], [0], [0]>} : vector<1x8x8xbf16>, vector<1x8x8xbf16>, vector<1x8x8xf32> -> vector<1x8x8xf32>
    "tpu.trace_stop"() : () -> ()
    %32 = vector.extract_strided_slice %7 {offsets = [0, 8], sizes = [8, 8], strides = [1, 1]} : vector<8x96xf32> to vector<8x8xf32>
    %33 = vector.shape_cast %32 : vector<8x8xf32> to vector<1x8x8xf32>
    %34 = vector.extract_strided_slice %7 {offsets = [0, 40], sizes = [8, 8], strides = [1, 1]} : vector<8x96xf32> to vector<8x8xf32>
    %35 = vector.shape_cast %34 : vector<8x8xf32> to vector<1x8x8xf32>
    %36 = vector.extract_strided_slice %7 {offsets = [0, 72], sizes = [8, 8], strides = [1, 1]} : vector<8x96xf32> to vector<8x8xf32>
    %37 = vector.shape_cast %36 : vector<8x8xf32> to vector<1x8x8xf32>
    %38 = arith.truncf %33 : vector<1x8x8xf32> to vector<1x8x8xbf16>
    %39 = arith.truncf %35 : vector<1x8x8xf32> to vector<1x8x8xbf16>
    "tpu.trace_start"() <{level = 10 : i32, message = "bqd,bkd->bqk"}> : () -> ()
    %cst_11 = arith.constant dense<0.000000e+00> : vector<1x8x8xf32>
    %40 = tpu.matmul %38, %39, %cst_11 {dimension_numbers = #tpu.dot_dimension_numbers<[2], [2], [1], [1], [0, 0, 0, 1, 1, 1], [0], [0]>} : vector<1x8x8xbf16>, vector<1x8x8xbf16>, vector<1x8x8xf32> -> vector<1x8x8xf32>
    "tpu.trace_stop"() : () -> ()
    %cst_12 = arith.constant 0.353553385 : f32
    %41 = vector.broadcast %cst_12 : f32 to vector<1x8x8xf32>
    %42 = arith.mulf %40, %41 : vector<1x8x8xf32>
    %cst_13 = arith.constant dense<0xFF800000> : vector<1x8xf32>
    %43 = vector.multi_reduction <maximumf>, %42, %cst_13 [2] : vector<1x8x8xf32> to vector<1x8xf32>
    %44 = vector.shape_cast %43 : vector<1x8xf32> to vector<1x8x1xf32>
    %45 = vector.broadcast %44 : vector<1x8x1xf32> to vector<1x8x8xf32>
    %46 = arith.subf %42, %45 : vector<1x8x8xf32>
    %47 = math.exp %46 : vector<1x8x8xf32>
    %cst_14 = arith.constant dense<0.000000e+00> : vector<1x8xf32>
    %48 = vector.multi_reduction <add>, %47, %cst_14 [2] : vector<1x8x8xf32> to vector<1x8xf32>
    %49 = vector.shape_cast %48 : vector<1x8xf32> to vector<1x8x1xf32>
    %50 = tpu.reciprocal %49 {approx = true} : vector<1x8x1xf32> -> vector<1x8x1xf32>
    %51 = vector.broadcast %50 : vector<1x8x1xf32> to vector<1x8x8xf32>
    %52 = arith.mulf %47, %51 : vector<1x8x8xf32>
    %53 = arith.truncf %52 : vector<1x8x8xf32> to vector<1x8x8xbf16>
    %54 = arith.truncf %37 : vector<1x8x8xf32> to vector<1x8x8xbf16>
    "tpu.trace_start"() <{level = 10 : i32, message = "bqk,bkd->bqd"}> : () -> ()
    %cst_15 = arith.constant dense<0.000000e+00> : vector<1x8x8xf32>
    %55 = tpu.matmul %53, %54, %cst_15 {dimension_numbers = #tpu.dot_dimension_numbers<[2], [1], [1], [2], [0, 0, 0, 1, 1, 2], [0], [0]>} : vector<1x8x8xbf16>, vector<1x8x8xbf16>, vector<1x8x8xf32> -> vector<1x8x8xf32>
    "tpu.trace_stop"() : () -> ()
    %56 = vector.extract_strided_slice %7 {offsets = [0, 16], sizes = [8, 8], strides = [1, 1]} : vector<8x96xf32> to vector<8x8xf32>
    %57 = vector.shape_cast %56 : vector<8x8xf32> to vector<1x8x8xf32>
    %58 = vector.extract_strided_slice %7 {offsets = [0, 48], sizes = [8, 8], strides = [1, 1]} : vector<8x96xf32> to vector<8x8xf32>
    %59 = vector.shape_cast %58 : vector<8x8xf32> to vector<1x8x8xf32>
    %60 = vector.extract_strided_slice %7 {offsets = [0, 80], sizes = [8, 8], strides = [1, 1]} : vector<8x96xf32> to vector<8x8xf32>
    %61 = vector.shape_cast %60 : vector<8x8xf32> to vector<1x8x8xf32>
    %62 = arith.truncf %57 : vector<1x8x8xf32> to vector<1x8x8xbf16>
    %63 = arith.truncf %59 : vector<1x8x8xf32> to vector<1x8x8xbf16>
    "tpu.trace_start"() <{level = 10 : i32, message = "bqd,bkd->bqk"}> : () -> ()
    %cst_16 = arith.constant dense<0.000000e+00> : vector<1x8x8xf32>
    %64 = tpu.matmul %62, %63, %cst_16 {dimension_numbers = #tpu.dot_dimension_numbers<[2], [2], [1], [1], [0, 0, 0, 1, 1, 1], [0], [0]>} : vector<1x8x8xbf16>, vector<1x8x8xbf16>, vector<1x8x8xf32> -> vector<1x8x8xf32>
    "tpu.trace_stop"() : () -> ()
    %cst_17 = arith.constant 0.353553385 : f32
    %65 = vector.broadcast %cst_17 : f32 to vector<1x8x8xf32>
    %66 = arith.mulf %64, %65 : vector<1x8x8xf32>
    %cst_18 = arith.constant dense<0xFF800000> : vector<1x8xf32>
    %67 = vector.multi_reduction <maximumf>, %66, %cst_18 [2] : vector<1x8x8xf32> to vector<1x8xf32>
    %68 = vector.shape_cast %67 : vector<1x8xf32> to vector<1x8x1xf32>
    %69 = vector.broadcast %68 : vector<1x8x1xf32> to vector<1x8x8xf32>
    %70 = arith.subf %66, %69 : vector<1x8x8xf32>
    %71 = math.exp %70 : vector<1x8x8xf32>
    %cst_19 = arith.constant dense<0.000000e+00> : vector<1x8xf32>
    %72 = vector.multi_reduction <add>, %71, %cst_19 [2] : vector<1x8x8xf32> to vector<1x8xf32>
    %73 = vector.shape_cast %72 : vector<1x8xf32> to vector<1x8x1xf32>
    %74 = tpu.reciprocal %73 {approx = true} : vector<1x8x1xf32> -> vector<1x8x1xf32>
    %75 = vector.broadcast %74 : vector<1x8x1xf32> to vector<1x8x8xf32>
    %76 = arith.mulf %71, %75 : vector<1x8x8xf32>
    %77 = arith.truncf %76 : vector<1x8x8xf32> to vector<1x8x8xbf16>
    %78 = arith.truncf %61 : vector<1x8x8xf32> to vector<1x8x8xbf16>
    "tpu.trace_start"() <{level = 10 : i32, message = "bqk,bkd->bqd"}> : () -> ()
    %cst_20 = arith.constant dense<0.000000e+00> : vector<1x8x8xf32>
    %79 = tpu.matmul %77, %78, %cst_20 {dimension_numbers = #tpu.dot_dimension_numbers<[2], [1], [1], [2], [0, 0, 0, 1, 1, 2], [0], [0]>} : vector<1x8x8xbf16>, vector<1x8x8xbf16>, vector<1x8x8xf32> -> vector<1x8x8xf32>
    "tpu.trace_stop"() : () -> ()
    %80 = vector.extract_strided_slice %7 {offsets = [0, 24], sizes = [8, 8], strides = [1, 1]} : vector<8x96xf32> to vector<8x8xf32>
    %81 = vector.shape_cast %80 : vector<8x8xf32> to vector<1x8x8xf32>
    %82 = vector.extract_strided_slice %7 {offsets = [0, 56], sizes = [8, 8], strides = [1, 1]} : vector<8x96xf32> to vector<8x8xf32>
    %83 = vector.shape_cast %82 : vector<8x8xf32> to vector<1x8x8xf32>
    %84 = vector.extract_strided_slice %7 {offsets = [0, 88], sizes = [8, 8], strides = [1, 1]} : vector<8x96xf32> to vector<8x8xf32>
    %85 = vector.shape_cast %84 : vector<8x8xf32> to vector<1x8x8xf32>
    %86 = arith.truncf %81 : vector<1x8x8xf32> to vector<1x8x8xbf16>
    %87 = arith.truncf %83 : vector<1x8x8xf32> to vector<1x8x8xbf16>
    "tpu.trace_start"() <{level = 10 : i32, message = "bqd,bkd->bqk"}> : () -> ()
    %cst_21 = arith.constant dense<0.000000e+00> : vector<1x8x8xf32>
    %88 = tpu.matmul %86, %87, %cst_21 {dimension_numbers = #tpu.dot_dimension_numbers<[2], [2], [1], [1], [0, 0, 0, 1, 1, 1], [0], [0]>} : vector<1x8x8xbf16>, vector<1x8x8xbf16>, vector<1x8x8xf32> -> vector<1x8x8xf32>
    "tpu.trace_stop"() : () -> ()
    %cst_22 = arith.constant 0.353553385 : f32
    %89 = vector.broadcast %cst_22 : f32 to vector<1x8x8xf32>
    %90 = arith.mulf %88, %89 : vector<1x8x8xf32>
    %cst_23 = arith.constant dense<0xFF800000> : vector<1x8xf32>
    %91 = vector.multi_reduction <maximumf>, %90, %cst_23 [2] : vector<1x8x8xf32> to vector<1x8xf32>
    %92 = vector.shape_cast %91 : vector<1x8xf32> to vector<1x8x1xf32>
    %93 = vector.broadcast %92 : vector<1x8x1xf32> to vector<1x8x8xf32>
    %94 = arith.subf %90, %93 : vector<1x8x8xf32>
    %95 = math.exp %94 : vector<1x8x8xf32>
    %cst_24 = arith.constant dense<0.000000e+00> : vector<1x8xf32>
    %96 = vector.multi_reduction <add>, %95, %cst_24 [2] : vector<1x8x8xf32> to vector<1x8xf32>
    %97 = vector.shape_cast %96 : vector<1x8xf32> to vector<1x8x1xf32>
    %98 = tpu.reciprocal %97 {approx = true} : vector<1x8x1xf32> -> vector<1x8x1xf32>
    %99 = vector.broadcast %98 : vector<1x8x1xf32> to vector<1x8x8xf32>
    %100 = arith.mulf %95, %99 : vector<1x8x8xf32>
    %101 = arith.truncf %100 : vector<1x8x8xf32> to vector<1x8x8xbf16>
    %102 = arith.truncf %85 : vector<1x8x8xf32> to vector<1x8x8xbf16>
    "tpu.trace_start"() <{level = 10 : i32, message = "bqk,bkd->bqd"}> : () -> ()
    %cst_25 = arith.constant dense<0.000000e+00> : vector<1x8x8xf32>
    %103 = tpu.matmul %101, %102, %cst_25 {dimension_numbers = #tpu.dot_dimension_numbers<[2], [1], [1], [2], [0, 0, 0, 1, 1, 2], [0], [0]>} : vector<1x8x8xbf16>, vector<1x8x8xbf16>, vector<1x8x8xf32> -> vector<1x8x8xf32>
    "tpu.trace_stop"() : () -> ()
    %104 = tpu.concatenate %31, %55, %79, %103 in 2 : vector<1x8x8xf32>, vector<1x8x8xf32>, vector<1x8x8xf32>, vector<1x8x8xf32> -> vector<1x8x32xf32>
    %105 = vector.shape_cast %104 : vector<1x8x32xf32> to vector<8x32xf32>
    %106 = arith.truncf %105 : vector<8x32xf32> to vector<8x32xbf16>
    %c0_26 = arith.constant 0 : index
    %c0_27 = arith.constant 0 : index
    %107 = vector.load %arg4[%c0_26, %c0_27] : memref<32x32xbf16, #tpu.memory_space<vmem>>, vector<32x32xbf16>
    %cst_28 = arith.constant dense<0.000000e+00> : vector<8x32xf32>
    %108 = tpu.matmul %106, %107, %cst_28 {dimension_numbers = #tpu.dot_dimension_numbers<[1], [0], [0], [1], [0, 0, 1, 1], [], []>} : vector<8x32xbf16>, vector<32x32xbf16>, vector<8x32xf32> -> vector<8x32xf32>
    %c0_29 = arith.constant 0 : index
    %c0_30 = arith.constant 0 : index
    %109 = vector.load %arg5[%c0_29, %c0_30] : memref<1x32xf32, #tpu.memory_space<vmem>>, vector<1x32xf32>
    %110 = vector.broadcast %109 : vector<1x32xf32> to vector<8x32xf32>
    %111 = arith.addf %108, %110 : vector<8x32xf32>
    %112 = arith.addf %1, %111 : vector<8x32xf32>
    %cst_31 = arith.constant dense<0.000000e+00> : vector<8xf32>
    %113 = vector.multi_reduction <add>, %112, %cst_31 [1] : vector<8x32xf32> to vector<8xf32>
    %114 = vector.shape_cast %113 : vector<8xf32> to vector<8x1xf32>
    %cst_32 = arith.constant 3.200000e+01 : f32
    %115 = vector.broadcast %cst_32 : f32 to vector<8x1xf32>
    %116 = arith.divf %114, %115 : vector<8x1xf32>
    %117 = vector.broadcast %116 : vector<8x1xf32> to vector<8x32xf32>
    %118 = arith.subf %112, %117 : vector<8x32xf32>
    %119 = arith.mulf %118, %118 : vector<8x32xf32>
    %cst_33 = arith.constant dense<0.000000e+00> : vector<8xf32>
    %120 = vector.multi_reduction <add>, %119, %cst_33 [1] : vector<8x32xf32> to vector<8xf32>
    %121 = vector.shape_cast %120 : vector<8xf32> to vector<8x1xf32>
    %cst_34 = arith.constant 3.200000e+01 : f32
    %122 = vector.broadcast %cst_34 : f32 to vector<8x1xf32>
    %123 = arith.divf %121, %122 : vector<8x1xf32>
    %124 = vector.broadcast %116 : vector<8x1xf32> to vector<8x32xf32>
    %125 = arith.subf %112, %124 : vector<8x32xf32>
    %cst_35 = arith.constant 9.99999974E-6 : f32
    %126 = vector.broadcast %cst_35 : f32 to vector<8x1xf32>
    %127 = arith.addf %123, %126 : vector<8x1xf32>
    %128 = math.rsqrt %127 : vector<8x1xf32>
    %129 = vector.broadcast %128 : vector<8x1xf32> to vector<8x32xf32>
    %130 = arith.mulf %125, %129 : vector<8x32xf32>
    %c0_36 = arith.constant 0 : index
    %c0_37 = arith.constant 0 : index
    %131 = vector.load %arg6[%c0_36, %c0_37] : memref<1x32xf32, #tpu.memory_space<vmem>>, vector<1x32xf32>
    %132 = vector.broadcast %131 : vector<1x32xf32> to vector<8x32xf32>
    %133 = arith.mulf %130, %132 : vector<8x32xf32>
    %c0_38 = arith.constant 0 : index
    %c0_39 = arith.constant 0 : index
    %134 = vector.load %arg7[%c0_38, %c0_39] : memref<1x32xf32, #tpu.memory_space<vmem>>, vector<1x32xf32>
    %135 = vector.broadcast %134 : vector<1x32xf32> to vector<8x32xf32>
    %136 = arith.addf %133, %135 : vector<8x32xf32>
    %137 = vector.shape_cast %136 : vector<8x32xf32> to vector<1x8x32xf32>
    %c0_40 = arith.constant 0 : index
    %c0_41 = arith.constant 0 : index
    %c0_42 = arith.constant 0 : index
    %138 = vector.load %arg8[%c0_40, %c0_41, %c0_42] : memref<1x8x32xf32, #tpu.memory_space<vmem>>, vector<1x8x32xf32>
    tpu.vector_store %arg8[%c0_40, %c0_41, %c0_42], %137 {strides = array<i32>} : memref<1x8x32xf32, #tpu.memory_space<vmem>>, vector<1x8x32xf32>,
    return
  }
  func.func @transform_0(%arg0: i32) -> (i32, i32, i32) {
    %c0_i32 = arith.constant 0 : i32
    %c0_i32_0 = arith.constant 0 : i32
    %c0_i32_1 = arith.constant 0 : i32
    return %arg0, %c0_i32, %c0_i32_0 : i32, i32, i32
  }
  func.func @transform_1(%arg0: i32) -> (i32, i32) {
    %c0_i32 = arith.constant 0 : i32
    %c0_i32_0 = arith.constant 0 : i32
    %c0_i32_1 = arith.constant 0 : i32
    return %c0_i32, %c0_i32_0 : i32, i32
  }
  func.func @transform_2(%arg0: i32) -> (i32, i32) {
    %c0_i32 = arith.constant 0 : i32
    %c0_i32_0 = arith.constant 0 : i32
    %c0_i32_1 = arith.constant 0 : i32
    return %c0_i32, %c0_i32_0 : i32, i32
  }
  func.func @transform_3(%arg0: i32) -> (i32, i32) {
    %c0_i32 = arith.constant 0 : i32
    %c0_i32_0 = arith.constant 0 : i32
    %c0_i32_1 = arith.constant 0 : i32
    return %c0_i32, %c0_i32_0 : i32, i32
  }
  func.func @transform_4(%arg0: i32) -> (i32, i32) {
    %c0_i32 = arith.constant 0 : i32
    %c0_i32_0 = arith.constant 0 : i32
    %c0_i32_1 = arith.constant 0 : i32
    return %c0_i32, %c0_i32_0 : i32, i32
  }
  func.func @transform_5(%arg0: i32) -> (i32, i32) {
    %c0_i32 = arith.constant 0 : i32
    %c0_i32_0 = arith.constant 0 : i32
    %c0_i32_1 = arith.constant 0 : i32
    return %c0_i32, %c0_i32_0 : i32, i32
  }
  func.func @transform_6(%arg0: i32) -> (i32, i32) {
    %c0_i32 = arith.constant 0 : i32
    %c0_i32_0 = arith.constant 0 : i32
    %c0_i32_1 = arith.constant 0 : i32
    return %c0_i32, %c0_i32_0 : i32, i32
  }
  func.func @transform_7(%arg0: i32) -> (i32, i32, i32) {
    %c0_i32 = arith.constant 0 : i32
    %c0_i32_0 = arith.constant 0 : i32
    %c0_i32_1 = arith.constant 0 : i32
    return %arg0, %c0_i32, %c0_i32_0 : i32, i32, i32
  }
}

</mosaic_0001>

<llo_original>
// kernel: tpu_custom_call.1
$region0: #{tpu_custom_call.1}
  #allocation0 [shape = 'u32[]', space=smem, size = 0x4, offset = 0x4, fixed_abs, tag = 'smem constant byte address 0x4 - core index']
  #allocation1 [shape = 'u32[144,128]{1,0:T(1,128)}', space=vmem, size = 0x12000, scoped, tag = 'internal scratch']
  %s0 = inlined_call_operand.hbm [shape: f32[2,8,32], index: 0, kind: input, shape index: {}]
  %s1 = inlined_call_operand.hbm [shape: bf16[32,96], index: 1, kind: input, shape index: {}]
  %s2 = inlined_call_operand.vmem [shape: f32[1,96], index: 2, kind: input, shape index: {}]
  %s3 = inlined_call_operand.hbm [shape: bf16[32,32], index: 3, kind: input, shape index: {}]
  %s4 = inlined_call_operand.vmem [shape: f32[1,32], index: 4, kind: input, shape index: {}]
  %s5 = inlined_call_operand.vmem [shape: f32[1,32], index: 5, kind: input, shape index: {}]
  %s6 = inlined_call_operand.vmem [shape: f32[1,32], index: 6, kind: input, shape index: {}]
  %s7 = inlined_call_operand.hbm [shape: f32[2,8,32], index: 7, kind: output, shape index: {}]
  %s8 = sld [smem:[#allocation0]]
  $region73: #{tpu_custom_call.1} parent=0
    _
  %s10 = ssub.s32 1, %s8
  %s11 = scalar_select 0, %s10, %s8
  $region1: #{tpu_custom_call.1} parent=0
    #allocation2 [shape = 'u8[8192]{0}', space=vmem, size = 0x2000, scoped, tag = 'input window, operand 0']
    #allocation3 [shape = 's32[2]{0}', space=sflag, size = 0x8, scoped, tag = 'scoped memory for tpu_custom_call.1']
    #allocation4 [shape = 's32[2]{0}', space=sflag, size = 0x8, scoped, tag = 'scoped memory for tpu_custom_call.1']
    #allocation5 [shape = 'u8[8192]{0}', space=vmem, size = 0x2000, scoped, tag = 'input window, operand 1, single buffered']
    #allocation6 [shape = 's32[1]{0}', space=sflag, size = 0x4, scoped, tag = 'scoped memory for tpu_custom_call.1']
    #allocation7 [shape = 'u8[8192]{0}', space=vmem, size = 0x2000, scoped, tag = 'input window, operand 3, single buffered']
    #allocation8 [shape = 'u8[8192]{0}', space=vmem, size = 0x2000, scoped, tag = 'output window, operand 0']
    %12 = vsyncpa [#allocation3], 0
    %s13 = scalar_lea.sflag [#allocation3], 1
    %14 = vsyncpa %s13, 0
    %15 = vsyncpa [#allocation6], 0
    %16 = vsyncpa [#allocation4], 0
    %s17 = scalar_lea.sflag [#allocation4], 1
    %18 = vsyncpa %s17, 0
    loop: start=0, step=1, limit=4
    $region2: #{tpu_custom_call.1} parent=1 // loop_pre_header
      _
    $region3: #{tpu_custom_call.1} parent=1 // loop_header
      %s20 = sphi 0, %s24
      %p21 = scmp.ge.s32.totalorder %s20, 4
      %s30 = sphi 0, %s32
      %s33 = sphi 0, %s30
      %s34 = sphi 0, %s33
      %s50 = sphi 0, %s34
      %s54 = sphi 0, %s54
      %s56 = sphi 0, %s54
      %s57 = sphi 0, %s56
      %s71 = sphi 0, %s57
      %s75 = sphi 0, %s75
      %s77 = sphi 0, %s75
      %s78 = sphi 0, %s77
      %s92 = sphi 0, %s78
      %s96 = sphi 0, %s96
      %s98 = sphi 0, %s96
      %s99 = sphi 0, %s98
      %s113 = sphi 0, %s99
      %s117 = sphi 0, %s117
      %s119 = sphi 0, %s117
      %s120 = sphi 0, %s119
      %s134 = sphi 0, %s120
      %s138 = sphi 0, %s138
      %s140 = sphi 0, %s138
      %s141 = sphi 0, %s140
      %s155 = sphi 0, %s141
      %s159 = sphi 0, %s159
      %s161 = sphi 0, %s159
      %s162 = sphi 0, %s161
      %s176 = sphi 0, %s162
      %s182 = sphi 0, %s184
      %s185 = sphi 0, %s182
      %s186 = sphi 0, %s185
      %s202 = sphi 0, %s186
    $region4: #{tpu_custom_call.1} parent=1 // loop_header_branch
      %23 = sbr.rel (%p21) target = $region8
    $region5: #{tpu_custom_call.1} parent=1 // loop_body
      %s25 = ssub.s32 %s20, 1
      %s26 = ssub.s32 %s20, 2
      %s27 = sadd.s32 %s20, 1
      %s28 = ssub.s32 %s20, %s27
      %p29 = scmp.eq.s32.totalorder %s28, 0
      %s31 = sadd.s32 %s30, 1
      %s32 = scalar_select %p29, %s30, %s31
      %p35 = pneg %p29
      %p36 = scmp.eq.s32.totalorder %s20, 1
      %p37 = por %p35, %p36
      %p38 = scmp.ne.s32.totalorder %s30, %s33
      %p39 = scmp.eq.s32.totalorder %s20, 0
      %p40 = por %p38, %p39
      %p41 = scmp.ne.s32.totalorder %s30, %s33
      %p42 = scmp.eq.s32.totalorder %s25, 1
      %p43 = por %p41, %p42
      %p44 = scmp.ne.s32.totalorder %s33, %s34
      %p45 = scmp.eq.s32.totalorder %s25, 0
      %p46 = por %p44, %p45
      %p47 = scmp.ne.s32.totalorder %s33, %s34
      %p48 = scmp.eq.s32.totalorder %s26, 1
      %p49 = por %p47, %p48
      %p51 = scmp.ne.s32.totalorder %s34, %s50
      %p52 = scmp.eq.s32.totalorder %s26, 0
      %p53 = por %p51, %p52
      %s55 = sadd.s32 %s54, 1
      %p58 = scmp.eq.s32.totalorder %s20, 1
      %p59 = scmp.ne.s32.totalorder %s54, %s56
      %p60 = scmp.eq.s32.totalorder %s20, 0
      %p61 = por %p59, %p60
      %p62 = scmp.ne.s32.totalorder %s54, %s56
      %p63 = scmp.eq.s32.totalorder %s25, 1
      %p64 = por %p62, %p63
      %p65 = scmp.ne.s32.totalorder %s56, %s57
      %p66 = scmp.eq.s32.totalorder %s25, 0
      %p67 = por %p65, %p66
      %p68 = scmp.ne.s32.totalorder %s56, %s57
      %p69 = scmp.eq.s32.totalorder %s26, 1
      %p70 = por %p68, %p69
      %p72 = scmp.ne.s32.totalorder %s57, %s71
      %p73 = scmp.eq.s32.totalorder %s26, 0
      %p74 = por %p72, %p73
      %s76 = sadd.s32 %s75, 1
      %p79 = scmp.eq.s32.totalorder %s20, 1
      %p80 = scmp.ne.s32.totalorder %s75, %s77
      %p81 = scmp.eq.s32.totalorder %s20, 0
      %p82 = por %p80, %p81
      %p83 = scmp.ne.s32.totalorder %s75, %s77
      %p84 = scmp.eq.s32.totalorder %s25, 1
      %p85 = por %p83, %p84
      %p86 = scmp.ne.s32.totalorder %s77, %s78
      %p87 = scmp.eq.s32.totalorder %s25, 0
      %p88 = por %p86, %p87
      %p89 = scmp.ne.s32.totalorder %s77, %s78
      %p90 = scmp.eq.s32.totalorder %s26, 1
      %p91 = por %p89, %p90
      %p93 = scmp.ne.s32.totalorder %s78, %s92
      %p94 = scmp.eq.s32.totalorder %s26, 0
      %p95 = por %p93, %p94
      %s97 = sadd.s32 %s96, 1
      %p100 = scmp.eq.s32.totalorder %s20, 1
      %p101 = scmp.ne.s32.totalorder %s96, %s98
      %p102 = scmp.eq.s32.totalorder %s20, 0
      %p103 = por %p101, %p102
      %p104 = scmp.ne.s32.totalorder %s96, %s98
      %p105 = scmp.eq.s32.totalorder %s25, 1
      %p106 = por %p104, %p105
      %p107 = scmp.ne.s32.totalorder %s98, %s99
      %p108 = scmp.eq.s32.totalorder %s25, 0
      %p109 = por %p107, %p108
      %p110 = scmp.ne.s32.totalorder %s98, %s99
      %p111 = scmp.eq.s32.totalorder %s26, 1
      %p112 = por %p110, %p111
      %p114 = scmp.ne.s32.totalorder %s99, %s113
      %p115 = scmp.eq.s32.totalorder %s26, 0
      %p116 = por %p114, %p115
      %s118 = sadd.s32 %s117, 1
      %p121 = scmp.eq.s32.totalorder %s20, 1
      %p122 = scmp.ne.s32.totalorder %s117, %s119
      %p123 = scmp.eq.s32.totalorder %s20, 0
      %p124 = por %p122, %p123
      %p125 = scmp.ne.s32.totalorder %s117, %s119
      %p126 = scmp.eq.s32.totalorder %s25, 1
      %p127 = por %p125, %p126
      %p128 = scmp.ne.s32.totalorder %s119, %s120
      %p129 = scmp.eq.s32.totalorder %s25, 0
      %p130 = por %p128, %p129
      %p131 = scmp.ne.s32.totalorder %s119, %s120
      %p132 = scmp.eq.s32.totalorder %s26, 1
      %p133 = por %p131, %p132
      %p135 = scmp.ne.s32.totalorder %s120, %s134
      %p136 = scmp.eq.s32.totalorder %s26, 0
      %p137 = por %p135, %p136
      %s139 = sadd.s32 %s138, 1
      %p142 = scmp.eq.s32.totalorder %s20, 1
      %p143 = scmp.ne.s32.totalorder %s138, %s140
      %p144 = scmp.eq.s32.totalorder %s20, 0
      %p145 = por %p143, %p144
      %p146 = scmp.ne.s32.totalorder %s138, %s140
      %p147 = scmp.eq.s32.totalorder %s25, 1
      %p148 = por %p146, %p147
      %p149 = scmp.ne.s32.totalorder %s140, %s141
      %p150 = scmp.eq.s32.totalorder %s25, 0
      %p151 = por %p149, %p150
      %p152 = scmp.ne.s32.totalorder %s140, %s141
      %p153 = scmp.eq.s32.totalorder %s26, 1
      %p154 = por %p152, %p153
      %p156 = scmp.ne.s32.totalorder %s141, %s155
      %p157 = scmp.eq.s32.totalorder %s26, 0
      %p158 = por %p156, %p157
      %s160 = sadd.s32 %s159, 1
      %p163 = scmp.eq.s32.totalorder %s20, 1
      %p164 = scmp.ne.s32.totalorder %s159, %s161
      %p165 = scmp.eq.s32.totalorder %s20, 0
      %p166 = por %p164, %p165
      %p167 = scmp.ne.s32.totalorder %s159, %s161
      %p168 = scmp.eq.s32.totalorder %s25, 1
      %p169 = por %p167, %p168
      %p170 = scmp.ne.s32.totalorder %s161, %s162
      %p171 = scmp.eq.s32.totalorder %s25, 0
      %p172 = por %p170, %p171
      %p173 = scmp.ne.s32.totalorder %s161, %s162
      %p174 = scmp.eq.s32.totalorder %s26, 1
      %p175 = por %p173, %p174
      %p177 = scmp.ne.s32.totalorder %s162, %s176
      %p178 = scmp.eq.s32.totalorder %s26, 0
      %p179 = por %p177, %p178
      %s180 = ssub.s32 %s20, %s27
      %p181 = scmp.eq.s32.totalorder %s180, 0
      %s183 = sadd.s32 %s182, 1
      %s184 = scalar_select %p181, %s182, %s183
      %p187 = pneg %p181
      %p188 = scmp.eq.s32.totalorder %s20, 1
      %p189 = por %p187, %p188
      %p190 = scmp.ne.s32.totalorder %s182, %s185
      %p191 = scmp.eq.s32.totalorder %s20, 0
      %p192 = por %p190, %p191
      %p193 = scmp.ne.s32.totalorder %s182, %s185
      %p194 = scmp.eq.s32.totalorder %s25, 1
      %p195 = por %p193, %p194
      %p196 = scmp.ne.s32.totalorder %s185, %s186
      %p197 = scmp.eq.s32.totalorder %s25, 0
      %p198 = por %p196, %p197
      %p199 = scmp.ne.s32.totalorder %s185, %s186
      %p200 = scmp.eq.s32.totalorder %s26, 1
      %p201 = por %p199, %p200
      %p203 = scmp.ne.s32.totalorder %s186, %s202
      %p204 = scmp.eq.s32.totalorder %s26, 0
      %p205 = por %p203, %p204
      %p206 = scmp.le.s32.totalorder 1, %s20
      %p207 = scmp.lt.s32.totalorder %s20, 3
      %p208 = pnand %p206, %p207
      %p209 = pneg %p208
      // Predicated region
      $region9: #{tpu_custom_call.1} parent=5 // pred_check
        _
      $region10: #{tpu_custom_call.1} parent=5 // pred_check_branch
        %211 = sbr.rel (%p208) target = $region12
      $region11: #{tpu_custom_call.1} parent=5 // pred_region
        %s212 = ssub.s32 %s20, 1
        // Predicated region
        $region13: #{tpu_custom_call.1} parent=11 // pred_check
          %p213 = pneg %p67
        $region14: #{tpu_custom_call.1} parent=11 // pred_check_branch
          %215 = sbr.rel (%p213) target = $region16
        $region15: #{tpu_custom_call.1} parent=11 // pred_region
          %s217 = ssub.s32 256, 256
          %218 = vsyncadd [#allocation6], %s217
          %s219 = sshll.u32 [#allocation5], 4
          %s220 = int_to_ptr.vmem [resolvable:$true] %s219
          %225 = dma.hbm_to_vmem [thread:$0]  %s1, 256, %s220, [#allocation6], 64, 64, 4
        $region16: #{tpu_custom_call.1} parent=11 // pred_fallthru
          _
        // Predicated region
        $region17: #{tpu_custom_call.1} parent=11 // pred_check
          %p226 = pneg %p88
        $region18: #{tpu_custom_call.1} parent=11 // pred_check_branch
          %228 = sbr.rel (%p226) target = $region20
        $region19: #{tpu_custom_call.1} parent=11 // pred_region
          _
        $region20: #{tpu_custom_call.1} parent=11 // pred_fallthru
          _
        // Predicated region
        $region21: #{tpu_custom_call.1} parent=11 // pred_check
          %p229 = pneg %p109
        $region22: #{tpu_custom_call.1} parent=11 // pred_check_branch
          %231 = sbr.rel (%p229) target = $region24
        $region23: #{tpu_custom_call.1} parent=11 // pred_region
          %s233 = ssub.s32 256, 256
          %234 = vsyncadd [#allocation6], %s233
          %s235 = sshll.u32 [#allocation7], 4
          %s236 = int_to_ptr.vmem [resolvable:$true] %s235
          %241 = dma.hbm_to_vmem [thread:$0]  %s3, 256, %s236, [#allocation6], 64, 64, 4
        $region24: #{tpu_custom_call.1} parent=11 // pred_fallthru
          _
        // Predicated region
        $region25: #{tpu_custom_call.1} parent=11 // pred_check
          %p242 = pneg %p130
        $region26: #{tpu_custom_call.1} parent=11 // pred_check_branch
          %244 = sbr.rel (%p242) target = $region28
        $region27: #{tpu_custom_call.1} parent=11 // pred_region
          _
        $region28: #{tpu_custom_call.1} parent=11 // pred_fallthru
          _
        // Predicated region
        $region29: #{tpu_custom_call.1} parent=11 // pred_check
          %p245 = pneg %p151
        $region30: #{tpu_custom_call.1} parent=11 // pred_check_branch
          %247 = sbr.rel (%p245) target = $region32
        $region31: #{tpu_custom_call.1} parent=11 // pred_region
          _
        $region32: #{tpu_custom_call.1} parent=11 // pred_fallthru
          _
        // Predicated region
        $region33: #{tpu_custom_call.1} parent=11 // pred_check
          %p248 = pneg %p172
        $region34: #{tpu_custom_call.1} parent=11 // pred_check_branch
          %250 = sbr.rel (%p248) target = $region36
        $region35: #{tpu_custom_call.1} parent=11 // pred_region
          _
        $region36: #{tpu_custom_call.1} parent=11 // pred_fallthru
          _
      $region12: #{tpu_custom_call.1} parent=5 // pred_fallthru
        _
      %p251 = scmp.lt.s32.totalorder %s20, 2
      // Predicated region
      $region37: #{tpu_custom_call.1} parent=5 // pred_check
        %p252 = pneg %p251
      $region38: #{tpu_custom_call.1} parent=5 // pred_check_branch
        %254 = sbr.rel (%p252) target = $region40
      $region39: #{tpu_custom_call.1} parent=5 // pred_region
        // Predicated region
        $region41: #{tpu_custom_call.1} parent=39 // pred_check
          %p255 = pneg %p40
        $region42: #{tpu_custom_call.1} parent=39 // pred_check_branch
          %257 = sbr.rel (%p255) target = $region44
        $region43: #{tpu_custom_call.1} parent=39 // pred_region
          %s258 = sand.u32 %s30, 1
          %s259 = scalar_lea.sflag [#allocation3], %s258
          %s260 = sand.u32 %s30, 1
          %s261 = smul.addr %s260, 8
          %s262 = scalar_lea.vmem [#allocation2], %s261
          %s264 = ssub.s32 128, 128
          %265 = vsyncadd %s259, %s264
          %s266 = smul.addr %s20, 128
          %s267 = scalar_lea.hbm %s0, %s266
          %s269 = sshll.u32 %s262, 4
          %s270 = int_to_ptr.vmem [resolvable:$true] %s269
          %272 = dma.hbm_to_vmem [thread:$0]  %s267, 128, %s270, %s259
        $region44: #{tpu_custom_call.1} parent=39 // pred_fallthru
          _
      $region40: #{tpu_custom_call.1} parent=5 // pred_fallthru
        _
      %p273 = scmp.le.s32.totalorder 1, %s20
      %p274 = scmp.lt.s32.totalorder %s20, 3
      %p275 = pnand %p273, %p274
      %p276 = pneg %p275
      // Predicated region
      $region45: #{tpu_custom_call.1} parent=5 // pred_check
        _
      $region46: #{tpu_custom_call.1} parent=5 // pred_check_branch
        %278 = sbr.rel (%p275) target = $region48
      $region47: #{tpu_custom_call.1} parent=5 // pred_region
        %s279 = ssub.s32 %s20, 1
        %s280 = sand.u32 %s33, 1
        %s281 = scalar_lea.sflag [#allocation3], %s280
        %s282 = sand.u32 %s33, 1
        %s283 = smul.addr %s282, 8
        %s284 = scalar_lea.vmem [#allocation2], %s283
        // Predicated region
        $region49: #{tpu_custom_call.1} parent=47 // pred_check
          %p285 = pneg %p46
        $region50: #{tpu_custom_call.1} parent=47 // pred_check_branch
          %287 = sbr.rel (%p285) target = $region52
        $region51: #{tpu_custom_call.1} parent=47 // pred_region
          %288 = dma.done %s281, 128
        $region52: #{tpu_custom_call.1} parent=47 // pred_fallthru
          _
        // Predicated region
        $region53: #{tpu_custom_call.1} parent=47 // pred_check
          %p289 = pneg %p67
        $region54: #{tpu_custom_call.1} parent=47 // pred_check_branch
          %291 = sbr.rel (%p289) target = $region56
        $region55: #{tpu_custom_call.1} parent=47 // pred_region
          %292 = dma.done [#allocation6], 256
        $region56: #{tpu_custom_call.1} parent=47 // pred_fallthru
          _
        // Predicated region
        $region57: #{tpu_custom_call.1} parent=47 // pred_check
          %p293 = pneg %p109
        $region58: #{tpu_custom_call.1} parent=47 // pred_check_branch
          %295 = sbr.rel (%p293) target = $region60
        $region59: #{tpu_custom_call.1} parent=47 // pred_region
          %296 = dma.done [#allocation6], 256
        $region60: #{tpu_custom_call.1} parent=47 // pred_fallthru
          _
        %s297 = sand.u32 %s33, 1
        %s298 = scalar_lea.sflag [#allocation3], %s297
        %s299 = sand.u32 %s33, 1
        %s300 = smul.addr %s299, 8
        %s301 = scalar_lea.vmem [#allocation2], %s300
        %p302 = pneg %p46
        %p303 = pneg %p43
        %p304 = pneg %p67
        %p305 = pneg %p64
        %p306 = pneg %p88
        %p307 = pneg %p85
        %p308 = pneg %p109
        %p309 = pneg %p106
        %p310 = pneg %p130
        %p311 = pneg %p127
        %p312 = pneg %p151
        %p313 = pneg %p148
        %p314 = pneg %p172
        %p315 = pneg %p169
        %p316 = pneg %p198
        %p317 = pneg %p195
        %s318 = sand.u32 %s185, 1
        %s319 = scalar_lea.sflag [#allocation4], %s318
        %s320 = sand.u32 %s185, 1
        %s321 = smul.addr %s320, 8
        %s322 = scalar_lea.vmem [#allocation8], %s321
        %v324 = vld [vmem:[%s284] sm:$0xff]
        %v325 = vpack.c.bf16 %v324, %v324
        %v326 = vld [vmem:[#allocation5] sm:$0xf]
        %v327 = vld [vmem:[#allocation5 + $0x4] sm:$0xf]
        %v328 = vld [vmem:[#allocation5 + $0x8] sm:$0xf]
        %v329 = vld [vmem:[#allocation5 + $0xc] sm:$0xf]
        %v330 = vld [vmem:[%s2] sm:$0x1]
        %v332 = vlaneseq
        %v333 = vshrl.u32 %v332, 7
        %v334 = vsub.s32 0, %v333
        %v335 = vrot.slane %v330, %v334
        %v341 = vunpack.c.l.b16 %v326
        %v342 = vunpack.c.l.b16 %v327
        %v343 = vunpack.c.l.b16 %v328
        %v344 = vunpack.c.l.b16 %v329
        %v345 = vpack.c.b16 %v342, %v341
        %v346 = vpack.c.b16 %v344, %v343
        %vm349 = vcmask 261120
        %v351 = vsel %vm349, %v325, 0
        %353 = vmatprep.subr.bf16.mxu0 0
        %354 = vmatpush1.bf16.msra.mxu0 0
        %355 = vmatprep.subr.bf16.mxu0 0
        %356 = vmatpush1.bf16.msra.mxu0 0
        %357 = vmatprep.subr.bf16.mxu0 0
        %358 = vmatpush1.bf16.msra.mxu0 0
        %359 = vmatprep.subr.bf16.mxu0 0
        %360 = vmatpush1.bf16.msra.mxu0 0
        %361 = vmatprep.subr.bf16.mxu0 0
        %362 = vmatpush1.bf16.msra.mxu0 0
        %363 = vmatprep.subr.bf16.mxu0 0
        %364 = vmatpush1.bf16.msra.mxu0 0
        %365 = vmatprep.subr.bf16.mxu0 0
        %366 = vmatpush1.bf16.msra.mxu0 %v346
        %367 = vmatprep.subr.bf16.mxu0 0
        %368 = vmatpush1.bf16.msra.mxu0 %v345
        %369 = vmatprep.subr.bf16.mxu0 0
        %370 = vmatpush2.bf16.msra.mxu0 0
        %371 = vmatprep.subr.bf16.mxu0 0
        %372 = vmatpush2.bf16.msra.mxu0 0
        %373 = vmatprep.subr.bf16.mxu0 0
        %374 = vmatpush2.bf16.msra.mxu0 0
        %375 = vmatprep.subr.bf16.mxu0 0
        %376 = vmatpush2.bf16.msra.mxu0 0
        %377 = vmatprep.subr.bf16.mxu0 0
        %378 = vmatpush2.bf16.msra.mxu0 0
        %379 = vmatprep.subr.bf16.mxu0 0
        %380 = vmatpush2.bf16.msra.mxu0 0
        %381 = vmatprep.subr.bf16.mxu0 0
        %382 = vmatpush2.bf16.msra.mxu0 0
        %383 = vmatprep.subr.bf16.mxu0 0
        %384 = vmatpush2.bf16.msra.mxu0 0
        %385 = vmatprep.mubr.bf16.mxu0 0
        %386 = vmatmul.mubr.bf16.gmra.mxu0 %v351
        %v387 = vpop.f32.mrf.mxu0
        %v388 = vadd.f32 %v335, %v387
        %v389 = vpop.f32.mrf.mxu0
        %v390 = vpop.f32.mrf.mxu0
        %v391 = vpop.f32.mrf.mxu0
        %392 = vdwg.mxu0
        %v393 = vpack.c.bf16 %v388, %v388
        %395 = vrot.lane.b32.xlu0 %v393, 96
        %v396 = vpop.permute.xlu0 %395
        %vm397 = vcmask 64512
        %v399 = vsel %vm397, %v393, 0
        %v402 = vsel %vm397, %v396, 0
        %404 = vmatprep.subr.bf16.mxu0 0
        %405 = vmatpush1.bf16.xpose.msra.mxu0 0
        %406 = vmatprep.subr.bf16.mxu0 0
        %407 = vmatpush1.bf16.xpose.msra.mxu0 0
        %408 = vmatprep.subr.bf16.mxu0 0
        %409 = vmatpush1.bf16.xpose.msra.mxu0 0
        %410 = vmatprep.subr.bf16.mxu0 0
        %411 = vmatpush1.bf16.xpose.msra.mxu0 0
        %412 = vmatprep.subr.bf16.mxu0 0
        %413 = vmatpush1.bf16.xpose.msra.mxu0 0
        %414 = vmatprep.subr.bf16.mxu0 0
        %415 = vmatpush1.bf16.xpose.msra.mxu0 0
        %416 = vmatprep.subr.bf16.mxu0 0
        %417 = vmatpush1.bf16.xpose.msra.mxu0 0
        %418 = vmatprep.subr.bf16.mxu0 0
        %419 = vmatpush1.bf16.xpose.msra.mxu0 %v402
        %420 = vmatprep.subr.bf16.mxu0 0
        %421 = vmatpush2.bf16.xpose.msra.mxu0 0
        %422 = vmatprep.subr.bf16.mxu0 0
        %423 = vmatpush2.bf16.xpose.msra.mxu0 0
        %424 = vmatprep.subr.bf16.mxu0 0
        %425 = vmatpush2.bf16.xpose.msra.mxu0 0
        %426 = vmatprep.subr.bf16.mxu0 0
        %427 = vmatpush2.bf16.xpose.msra.mxu0 0
        %428 = vmatprep.subr.bf16.mxu0 0
        %429 = vmatpush2.bf16.xpose.msra.mxu0 0
        %430 = vmatprep.subr.bf16.mxu0 0
        %431 = vmatpush2.bf16.xpose.msra.mxu0 0
        %432 = vmatprep.subr.bf16.mxu0 0
        %433 = vmatpush2.bf16.xpose.msra.mxu0 0
        %434 = vmatprep.subr.bf16.mxu0 0
        %435 = vmatpush2.bf16.xpose.msra.mxu0 0
        %436 = vmatprep.mubr.bf16.mxu0 0
        %437 = vmatmul.mubr.bf16.gmra.mxu0 %v399
        %v438 = vpop.f32.mrf.mxu0
        %v439 = vadd.f32 0.0, %v438
        %v440 = vpop.f32.mrf.mxu0
        %v441 = vpop.f32.mrf.mxu0
        %v442 = vpop.f32.mrf.mxu0
        %443 = vdwg.mxu0
        %v444 = vmul.f32 %v439, 0.35355338
        %v445 = vsel %vm397, %v444, -inf
        %446 = vmax.xlane.f32.xlu0 %v445
        %v447 = vpop.xlane.xlu0 %446
        %v448 = vsub.f32 %v444, %v447
        %v449 = vmul.f32 %v448, 1.442695
        %v450 = vpow.pop %v449
        %v451 = vsel %vm397, %v450, 0.0
        %452 = vadd.xlane.f32.xlu0 %v451
        %v453 = vpop.xlane.xlu0 %452
        %v454 = vrcp.pop %v453
        %v455 = vmul.f32 %v450, %v454
        %v456 = vpack.c.bf16 %v455, %v455
        %457 = vrot.lane.b32.xlu0 %v393, 64
        %v458 = vpop.permute.xlu0 %457
        %v460 = vsel %vm397, %v456, 0
        %vm462 = vcmask 1043456
        %v464 = vsel %vm462, %v458, 0
        %466 = vmatprep.subr.bf16.mxu0 0
        %467 = vmatpush1.bf16.msra.mxu0 0
        %468 = vmatprep.subr.bf16.mxu0 0
        %469 = vmatpush1.bf16.msra.mxu0 0
        %470 = vmatprep.subr.bf16.mxu0 0
        %471 = vmatpush1.bf16.msra.mxu0 0
        %472 = vmatprep.subr.bf16.mxu0 0
        %473 = vmatpush1.bf16.msra.mxu0 0
        %474 = vmatprep.subr.bf16.mxu0 0
        %475 = vmatpush1.bf16.msra.mxu0 0
        %476 = vmatprep.subr.bf16.mxu0 0
        %477 = vmatpush1.bf16.msra.mxu0 0
        %478 = vmatprep.subr.bf16.mxu0 0
        %479 = vmatpush1.bf16.msra.mxu0 0
        %480 = vmatprep.subr.bf16.mxu0 0
        %481 = vmatpush1.bf16.msra.mxu0 %v464
        %482 = vmatprep.subr.bf16.mxu0 0
        %483 = vmatpush2.bf16.msra.mxu0 0
        %484 = vmatprep.subr.bf16.mxu0 0
        %485 = vmatpush2.bf16.msra.mxu0 0
        %486 = vmatprep.subr.bf16.mxu0 0
        %487 = vmatpush2.bf16.msra.mxu0 0
        %488 = vmatprep.subr.bf16.mxu0 0
        %489 = vmatpush2.bf16.msra.mxu0 0
        %490 = vmatprep.subr.bf16.mxu0 0
        %491 = vmatpush2.bf16.msra.mxu0 0
        %492 = vmatprep.subr.bf16.mxu0 0
        %493 = vmatpush2.bf16.msra.mxu0 0
        %494 = vmatprep.subr.bf16.mxu0 0
        %495 = vmatpush2.bf16.msra.mxu0 0
        %496 = vmatprep.subr.bf16.mxu0 0
        %497 = vmatpush2.bf16.msra.mxu0 0
        %498 = vmatprep.mubr.bf16.mxu0 0
        %499 = vmatmul.mubr.bf16.gmra.mxu0 %v460
        %v500 = vpop.f32.mrf.mxu0
        %v501 = vadd.f32 0.0, %v500
        %v502 = vpop.f32.mrf.mxu0
        %v503 = vpop.f32.mrf.mxu0
        %v504 = vpop.f32.mrf.mxu0
        %505 = vdwg.mxu0
        %506 = vrot.lane.b32.xlu0 %v393, 120
        %v507 = vpop.permute.xlu0 %506
        %508 = vrot.lane.b32.xlu0 %v393, 88
        %v509 = vpop.permute.xlu0 %508
        %v511 = vsel %vm397, %v507, 0
        %v514 = vsel %vm397, %v509, 0
        %516 = vmatprep.subr.bf16.mxu0 0
        %517 = vmatpush1.bf16.xpose.msra.mxu0 0
        %518 = vmatprep.subr.bf16.mxu0 0
        %519 = vmatpush1.bf16.xpose.msra.mxu0 0
        %520 = vmatprep.subr.bf16.mxu0 0
        %521 = vmatpush1.bf16.xpose.msra.mxu0 0
        %522 = vmatprep.subr.bf16.mxu0 0
        %523 = vmatpush1.bf16.xpose.msra.mxu0 0
        %524 = vmatprep.subr.bf16.mxu0 0
        %525 = vmatpush1.bf16.xpose.msra.mxu0 0
        %526 = vmatprep.subr.bf16.mxu0 0
        %527 = vmatpush1.bf16.xpose.msra.mxu0 0
        %528 = vmatprep.subr.bf16.mxu0 0
        %529 = vmatpush1.bf16.xpose.msra.mxu0 0
        %530 = vmatprep.subr.bf16.mxu0 0
        %531 = vmatpush1.bf16.xpose.msra.mxu0 %v514
        %532 = vmatprep.subr.bf16.mxu0 0
        %533 = vmatpush2.bf16.xpose.msra.mxu0 0
        %534 = vmatprep.subr.bf16.mxu0 0
        %535 = vmatpush2.bf16.xpose.msra.mxu0 0
        %536 = vmatprep.subr.bf16.mxu0 0
        %537 = vmatpush2.bf16.xpose.msra.mxu0 0
        %538 = vmatprep.subr.bf16.mxu0 0
        %539 = vmatpush2.bf16.xpose.msra.mxu0 0
        %540 = vmatprep.subr.bf16.mxu0 0
        %541 = vmatpush2.bf16.xpose.msra.mxu0 0
        %542 = vmatprep.subr.bf16.mxu0 0
        %543 = vmatpush2.bf16.xpose.msra.mxu0 0
        %544 = vmatprep.subr.bf16.mxu0 0
        %545 = vmatpush2.bf16.xpose.msra.mxu0 0
        %546 = vmatprep.subr.bf16.mxu0 0
        %547 = vmatpush2.bf16.xpose.msra.mxu0 0
        %548 = vmatprep.mubr.bf16.mxu0 0
        %549 = vmatmul.mubr.bf16.gmra.mxu0 %v511
        %v550 = vpop.f32.mrf.mxu0
        %v551 = vadd.f32 0.0, %v550
        %v552 = vpop.f32.mrf.mxu0
        %v553 = vpop.f32.mrf.mxu0
        %v554 = vpop.f32.mrf.mxu0
        %555 = vdwg.mxu0
        %v556 = vmul.f32 %v551, 0.35355338
        %v557 = vsel %vm397, %v556, -inf
        %558 = vmax.xlane.f32.xlu0 %v557
        %v559 = vpop.xlane.xlu0 %558
        %v560 = vsub.f32 %v556, %v559
        %v561 = vmul.f32 %v560, 1.442695
        %v562 = vpow.pop %v561
        %v563 = vsel %vm397, %v562, 0.0
        %564 = vadd.xlane.f32.xlu0 %v563
        %v565 = vpop.xlane.xlu0 %564
        %v566 = vrcp.pop %v565
        %v567 = vmul.f32 %v562, %v566
        %v568 = vpack.c.bf16 %v567, %v567
        %569 = vrot.lane.b32.xlu0 %v393, 56
        %v570 = vpop.permute.xlu0 %569
        %v572 = vsel %vm397, %v568, 0
        %v575 = vsel %vm462, %v570, 0
        %577 = vmatprep.subr.bf16.mxu0 0
        %578 = vmatpush1.bf16.msra.mxu0 0
        %579 = vmatprep.subr.bf16.mxu0 0
        %580 = vmatpush1.bf16.msra.mxu0 0
        %581 = vmatprep.subr.bf16.mxu0 0
        %582 = vmatpush1.bf16.msra.mxu0 0
        %583 = vmatprep.subr.bf16.mxu0 0
        %584 = vmatpush1.bf16.msra.mxu0 0
        %585 = vmatprep.subr.bf16.mxu0 0
        %586 = vmatpush1.bf16.msra.mxu0 0
        %587 = vmatprep.subr.bf16.mxu0 0
        %588 = vmatpush1.bf16.msra.mxu0 0
        %589 = vmatprep.subr.bf16.mxu0 0
        %590 = vmatpush1.bf16.msra.mxu0 0
        %591 = vmatprep.subr.bf16.mxu0 0
        %592 = vmatpush1.bf16.msra.mxu0 %v575
        %593 = vmatprep.subr.bf16.mxu0 0
        %594 = vmatpush2.bf16.msra.mxu0 0
        %595 = vmatprep.subr.bf16.mxu0 0
        %596 = vmatpush2.bf16.msra.mxu0 0
        %597 = vmatprep.subr.bf16.mxu0 0
        %598 = vmatpush2.bf16.msra.mxu0 0
        %599 = vmatprep.subr.bf16.mxu0 0
        %600 = vmatpush2.bf16.msra.mxu0 0
        %601 = vmatprep.subr.bf16.mxu0 0
        %602 = vmatpush2.bf16.msra.mxu0 0
        %603 = vmatprep.subr.bf16.mxu0 0
        %604 = vmatpush2.bf16.msra.mxu0 0
        %605 = vmatprep.subr.bf16.mxu0 0
        %606 = vmatpush2.bf16.msra.mxu0 0
        %607 = vmatprep.subr.bf16.mxu0 0
        %608 = vmatpush2.bf16.msra.mxu0 0
        %609 = vmatprep.mubr.bf16.mxu0 0
        %610 = vmatmul.mubr.bf16.gmra.mxu0 %v572
        %v611 = vpop.f32.mrf.mxu0
        %v612 = vadd.f32 0.0, %v611
        %v613 = vpop.f32.mrf.mxu0
        %v614 = vpop.f32.mrf.mxu0
        %v615 = vpop.f32.mrf.mxu0
        %616 = vdwg.mxu0
        %617 = vrot.lane.b32.xlu0 %v393, 112
        %v618 = vpop.permute.xlu0 %617
        %619 = vrot.lane.b32.xlu0 %v393, 80
        %v620 = vpop.permute.xlu0 %619
        %v622 = vsel %vm397, %v618, 0
        %v625 = vsel %vm397, %v620, 0
        %627 = vmatprep.subr.bf16.mxu0 0
        %628 = vmatpush1.bf16.xpose.msra.mxu0 0
        %629 = vmatprep.subr.bf16.mxu0 0
        %630 = vmatpush1.bf16.xpose.msra.mxu0 0
        %631 = vmatprep.subr.bf16.mxu0 0
        %632 = vmatpush1.bf16.xpose.msra.mxu0 0
        %633 = vmatprep.subr.bf16.mxu0 0
        %634 = vmatpush1.bf16.xpose.msra.mxu0 0
        %635 = vmatprep.subr.bf16.mxu0 0
        %636 = vmatpush1.bf16.xpose.msra.mxu0 0
        %637 = vmatprep.subr.bf16.mxu0 0
        %638 = vmatpush1.bf16.xpose.msra.mxu0 0
        %639 = vmatprep.subr.bf16.mxu0 0
        %640 = vmatpush1.bf16.xpose.msra.mxu0 0
        %641 = vmatprep.subr.bf16.mxu0 0
        %642 = vmatpush1.bf16.xpose.msra.mxu0 %v625
        %643 = vmatprep.subr.bf16.mxu0 0
        %644 = vmatpush2.bf16.xpose.msra.mxu0 0
        %645 = vmatprep.subr.bf16.mxu0 0
        %646 = vmatpush2.bf16.xpose.msra.mxu0 0
        %647 = vmatprep.subr.bf16.mxu0 0
        %648 = vmatpush2.bf16.xpose.msra.mxu0 0
        %649 = vmatprep.subr.bf16.mxu0 0
        %650 = vmatpush2.bf16.xpose.msra.mxu0 0
        %651 = vmatprep.subr.bf16.mxu0 0
        %652 = vmatpush2.bf16.xpose.msra.mxu0 0
        %653 = vmatprep.subr.bf16.mxu0 0
        %654 = vmatpush2.bf16.xpose.msra.mxu0 0
        %655 = vmatprep.subr.bf16.mxu0 0
        %656 = vmatpush2.bf16.xpose.msra.mxu0 0
        %657 = vmatprep.subr.bf16.mxu0 0
        %658 = vmatpush2.bf16.xpose.msra.mxu0 0
        %659 = vmatprep.mubr.bf16.mxu0 0
        %660 = vmatmul.mubr.bf16.gmra.mxu0 %v622
        %v661 = vpop.f32.mrf.mxu0
        %v662 = vadd.f32 0.0, %v661
        %v663 = vpop.f32.mrf.mxu0
        %v664 = vpop.f32.mrf.mxu0
        %v665 = vpop.f32.mrf.mxu0
        %666 = vdwg.mxu0
        %v667 = vmul.f32 %v662, 0.35355338
        %v668 = vsel %vm397, %v667, -inf
        %669 = vmax.xlane.f32.xlu0 %v668
        %v670 = vpop.xlane.xlu0 %669
        %v671 = vsub.f32 %v667, %v670
        %v672 = vmul.f32 %v671, 1.442695
        %v673 = vpow.pop %v672
        %v674 = vsel %vm397, %v673, 0.0
        %675 = vadd.xlane.f32.xlu0 %v674
        %v676 = vpop.xlane.xlu0 %675
        %v677 = vrcp.pop %v676
        %v678 = vmul.f32 %v673, %v677
        %v679 = vpack.c.bf16 %v678, %v678
        %680 = vrot.lane.b32.xlu0 %v393, 48
        %v681 = vpop.permute.xlu0 %680
        %v683 = vsel %vm397, %v679, 0
        %v686 = vsel %vm462, %v681, 0
        %688 = vmatprep.subr.bf16.mxu0 0
        %689 = vmatpush1.bf16.msra.mxu0 0
        %690 = vmatprep.subr.bf16.mxu0 0
        %691 = vmatpush1.bf16.msra.mxu0 0
        %692 = vmatprep.subr.bf16.mxu0 0
        %693 = vmatpush1.bf16.msra.mxu0 0
        %694 = vmatprep.subr.bf16.mxu0 0
        %695 = vmatpush1.bf16.msra.mxu0 0
        %696 = vmatprep.subr.bf16.mxu0 0
        %697 = vmatpush1.bf16.msra.mxu0 0
        %698 = vmatprep.subr.bf16.mxu0 0
        %699 = vmatpush1.bf16.msra.mxu0 0
        %700 = vmatprep.subr.bf16.mxu0 0
        %701 = vmatpush1.bf16.msra.mxu0 0
        %702 = vmatprep.subr.bf16.mxu0 0
        %703 = vmatpush1.bf16.msra.mxu0 %v686
        %704 = vmatprep.subr.bf16.mxu0 0
        %705 = vmatpush2.bf16.msra.mxu0 0
        %706 = vmatprep.subr.bf16.mxu0 0
        %707 = vmatpush2.bf16.msra.mxu0 0
        %708 = vmatprep.subr.bf16.mxu0 0
        %709 = vmatpush2.bf16.msra.mxu0 0
        %710 = vmatprep.subr.bf16.mxu0 0
        %711 = vmatpush2.bf16.msra.mxu0 0
        %712 = vmatprep.subr.bf16.mxu0 0
        %713 = vmatpush2.bf16.msra.mxu0 0
        %714 = vmatprep.subr.bf16.mxu0 0
        %715 = vmatpush2.bf16.msra.mxu0 0
        %716 = vmatprep.subr.bf16.mxu0 0
        %717 = vmatpush2.bf16.msra.mxu0 0
        %718 = vmatprep.subr.bf16.mxu0 0
        %719 = vmatpush2.bf16.msra.mxu0 0
        %720 = vmatprep.mubr.bf16.mxu0 0
        %721 = vmatmul.mubr.bf16.gmra.mxu0 %v683
        %v722 = vpop.f32.mrf.mxu0
        %v723 = vadd.f32 0.0, %v722
        %v724 = vpop.f32.mrf.mxu0
        %v725 = vpop.f32.mrf.mxu0
        %v726 = vpop.f32.mrf.mxu0
        %727 = vdwg.mxu0
        %728 = vrot.lane.b32.xlu0 %v393, 104
        %v729 = vpop.permute.xlu0 %728
        %730 = vrot.lane.b32.xlu0 %v393, 72
        %v731 = vpop.permute.xlu0 %730
        %v733 = vsel %vm397, %v729, 0
        %v736 = vsel %vm397, %v731, 0
        %738 = vmatprep.subr.bf16.mxu0 0
        %739 = vmatpush1.bf16.xpose.msra.mxu0 0
        %740 = vmatprep.subr.bf16.mxu0 0
        %741 = vmatpush1.bf16.xpose.msra.mxu0 0
        %742 = vmatprep.subr.bf16.mxu0 0
        %743 = vmatpush1.bf16.xpose.msra.mxu0 0
        %744 = vmatprep.subr.bf16.mxu0 0
        %745 = vmatpush1.bf16.xpose.msra.mxu0 0
        %746 = vmatprep.subr.bf16.mxu0 0
        %747 = vmatpush1.bf16.xpose.msra.mxu0 0
        %748 = vmatprep.subr.bf16.mxu0 0
        %749 = vmatpush1.bf16.xpose.msra.mxu0 0
        %750 = vmatprep.subr.bf16.mxu0 0
        %751 = vmatpush1.bf16.xpose.msra.mxu0 0
        %752 = vmatprep.subr.bf16.mxu0 0
        %753 = vmatpush1.bf16.xpose.msra.mxu0 %v736
        %754 = vmatprep.subr.bf16.mxu0 0
        %755 = vmatpush2.bf16.xpose.msra.mxu0 0
        %756 = vmatprep.subr.bf16.mxu0 0
        %757 = vmatpush2.bf16.xpose.msra.mxu0 0
        %758 = vmatprep.subr.bf16.mxu0 0
        %759 = vmatpush2.bf16.xpose.msra.mxu0 0
        %760 = vmatprep.subr.bf16.mxu0 0
        %761 = vmatpush2.bf16.xpose.msra.mxu0 0
        %762 = vmatprep.subr.bf16.mxu0 0
        %763 = vmatpush2.bf16.xpose.msra.mxu0 0
        %764 = vmatprep.subr.bf16.mxu0 0
        %765 = vmatpush2.bf16.xpose.msra.mxu0 0
        %766 = vmatprep.subr.bf16.mxu0 0
        %767 = vmatpush2.bf16.xpose.msra.mxu0 0
        %768 = vmatprep.subr.bf16.mxu0 0
        %769 = vmatpush2.bf16.xpose.msra.mxu0 0
        %770 = vmatprep.mubr.bf16.mxu0 0
        %771 = vmatmul.mubr.bf16.gmra.mxu0 %v733
        %v772 = vpop.f32.mrf.mxu0
        %v773 = vadd.f32 0.0, %v772
        %v774 = vpop.f32.mrf.mxu0
        %v775 = vpop.f32.mrf.mxu0
        %v776 = vpop.f32.mrf.mxu0
        %777 = vdwg.mxu0
        %v778 = vmul.f32 %v773, 0.35355338
        %v779 = vsel %vm397, %v778, -inf
        %780 = vmax.xlane.f32.xlu0 %v779
        %v781 = vpop.xlane.xlu0 %780
        %v782 = vsub.f32 %v778, %v781
        %v783 = vmul.f32 %v782, 1.442695
        %v784 = vpow.pop %v783
        %v785 = vsel %vm397, %v784, 0.0
        %786 = vadd.xlane.f32.xlu0 %v785
        %v787 = vpop.xlane.xlu0 %786
        %v788 = vrcp.pop %v787
        %v789 = vmul.f32 %v784, %v788
        %v790 = vpack.c.bf16 %v789, %v789
        %791 = vrot.lane.b32.xlu0 %v393, 40
        %v792 = vpop.permute.xlu0 %791
        %v794 = vsel %vm397, %v790, 0
        %v797 = vsel %vm462, %v792, 0
        %799 = vmatprep.subr.bf16.mxu0 0
        %800 = vmatpush1.bf16.msra.mxu0 0
        %801 = vmatprep.subr.bf16.mxu0 0
        %802 = vmatpush1.bf16.msra.mxu0 0
        %803 = vmatprep.subr.bf16.mxu0 0
        %804 = vmatpush1.bf16.msra.mxu0 0
        %805 = vmatprep.subr.bf16.mxu0 0
        %806 = vmatpush1.bf16.msra.mxu0 0
        %807 = vmatprep.subr.bf16.mxu0 0
        %808 = vmatpush1.bf16.msra.mxu0 0
        %809 = vmatprep.subr.bf16.mxu0 0
        %810 = vmatpush1.bf16.msra.mxu0 0
        %811 = vmatprep.subr.bf16.mxu0 0
        %812 = vmatpush1.bf16.msra.mxu0 0
        %813 = vmatprep.subr.bf16.mxu0 0
        %814 = vmatpush1.bf16.msra.mxu0 %v797
        %815 = vmatprep.subr.bf16.mxu0 0
        %816 = vmatpush2.bf16.msra.mxu0 0
        %817 = vmatprep.subr.bf16.mxu0 0
        %818 = vmatpush2.bf16.msra.mxu0 0
        %819 = vmatprep.subr.bf16.mxu0 0
        %820 = vmatpush2.bf16.msra.mxu0 0
        %821 = vmatprep.subr.bf16.mxu0 0
        %822 = vmatpush2.bf16.msra.mxu0 0
        %823 = vmatprep.subr.bf16.mxu0 0
        %824 = vmatpush2.bf16.msra.mxu0 0
        %825 = vmatprep.subr.bf16.mxu0 0
        %826 = vmatpush2.bf16.msra.mxu0 0
        %827 = vmatprep.subr.bf16.mxu0 0
        %828 = vmatpush2.bf16.msra.mxu0 0
        %829 = vmatprep.subr.bf16.mxu0 0
        %830 = vmatpush2.bf16.msra.mxu0 0
        %831 = vmatprep.mubr.bf16.mxu0 0
        %832 = vmatmul.mubr.bf16.gmra.mxu0 %v794
        %v833 = vpop.f32.mrf.mxu0
        %v834 = vadd.f32 0.0, %v833
        %v835 = vpop.f32.mrf.mxu0
        %v836 = vpop.f32.mrf.mxu0
        %v837 = vpop.f32.mrf.mxu0
        %838 = vdwg.mxu0
        %840 = vrot.lane.b32.xlu0 %v612, 8
        %v841 = vpop.permute.xlu0 %840
        %844 = vrot.lane.b32.xlu0 %v723, 16
        %v845 = vpop.permute.xlu0 %844
        %848 = vrot.lane.b32.xlu0 %v834, 24
        %v849 = vpop.permute.xlu0 %848
        %v851 = vsel %vm397, %v501, %v841
        %vm852 = vcmask 130048
        %v853 = vsel %vm852, %v851, %v845
        %vm854 = vcmask 195584
        %v855 = vsel %vm854, %v853, %v849
        %v856 = vpack.c.bf16 %v855, %v855
        %v857 = vld [vmem:[#allocation7] sm:$0xf]
        %v858 = vld [vmem:[#allocation7 + $0x4] sm:$0xf]
        %v859 = vld [vmem:[#allocation7 + $0x8] sm:$0xf]
        %v860 = vld [vmem:[#allocation7 + $0xc] sm:$0xf]
        %v861 = vld [vmem:[%s4] sm:$0x1]
        %v863 = vlaneseq
        %v864 = vshrl.u32 %v863, 7
        %v865 = vsub.s32 0, %v864
        %v866 = vrot.slane %v861, %v865
        %v872 = vunpack.c.l.b16 %v857
        %v873 = vunpack.c.l.b16 %v858
        %v874 = vunpack.c.l.b16 %v859
        %v875 = vunpack.c.l.b16 %v860
        %v876 = vpack.c.b16 %v873, %v872
        %v877 = vpack.c.b16 %v875, %v874
        %v881 = vsel %vm349, %v856, 0
        %883 = vmatprep.subr.bf16.mxu0 0
        %884 = vmatpush1.bf16.msra.mxu0 0
        %885 = vmatprep.subr.bf16.mxu0 0
        %886 = vmatpush1.bf16.msra.mxu0 0
        %887 = vmatprep.subr.bf16.mxu0 0
        %888 = vmatpush1.bf16.msra.mxu0 0
        %889 = vmatprep.subr.bf16.mxu0 0
        %890 = vmatpush1.bf16.msra.mxu0 0
        %891 = vmatprep.subr.bf16.mxu0 0
        %892 = vmatpush1.bf16.msra.mxu0 0
        %893 = vmatprep.subr.bf16.mxu0 0
        %894 = vmatpush1.bf16.msra.mxu0 0
        %895 = vmatprep.subr.bf16.mxu0 0
        %896 = vmatpush1.bf16.msra.mxu0 %v877
        %897 = vmatprep.subr.bf16.mxu0 0
        %898 = vmatpush1.bf16.msra.mxu0 %v876
        %899 = vmatprep.subr.bf16.mxu0 0
        %900 = vmatpush2.bf16.msra.mxu0 0
        %901 = vmatprep.subr.bf16.mxu0 0
        %902 = vmatpush2.bf16.msra.mxu0 0
        %903 = vmatprep.subr.bf16.mxu0 0
        %904 = vmatpush2.bf16.msra.mxu0 0
        %905 = vmatprep.subr.bf16.mxu0 0
        %906 = vmatpush2.bf16.msra.mxu0 0
        %907 = vmatprep.subr.bf16.mxu0 0
        %908 = vmatpush2.bf16.msra.mxu0 0
        %909 = vmatprep.subr.bf16.mxu0 0
        %910 = vmatpush2.bf16.msra.mxu0 0
        %911 = vmatprep.subr.bf16.mxu0 0
        %912 = vmatpush2.bf16.msra.mxu0 0
        %913 = vmatprep.subr.bf16.mxu0 0
        %914 = vmatpush2.bf16.msra.mxu0 0
        %915 = vmatprep.mubr.bf16.mxu0 0
        %916 = vmatmul.mubr.bf16.gmra.mxu0 %v881
        %v917 = vpop.f32.mrf.mxu0
        %v918 = vadd.f32 %v866, %v917
        %v919 = vpop.f32.mrf.mxu0
        %v920 = vpop.f32.mrf.mxu0
        %v921 = vpop.f32.mrf.mxu0
        %922 = vdwg.mxu0
        %v923 = vadd.f32 %v324, %v918
        %v924 = vsel %vm349, %v923, 0.0
        %925 = vadd.xlane.f32.xlu0 %v924
        %v926 = vpop.xlane.xlu0 %925
        %v927 = vrcp.pop 32.0
        %v928 = vmul.f32 %v926, %v927
        %v929 = vsub.f32 %v923, %v928
        %v930 = vmul.f32 %v929, %v929
        %v931 = vsel %vm349, %v930, 0.0
        %932 = vadd.xlane.f32.xlu0 %v931
        %v933 = vpop.xlane.xlu0 %932
        %v934 = vmul.f32 %v933, %v927
        %v935 = vadd.f32 %v934, 1e-05
        %v936 = vrsqrt.pop %v935
        %v937 = vmul.f32 %v929, %v936
        %v938 = vld [vmem:[%s5] sm:$0x1]
        %v940 = vlaneseq
        %v941 = vshrl.u32 %v940, 7
        %v942 = vsub.s32 0, %v941
        %v943 = vrot.slane %v938, %v942
        %v945 = vmul.f32 %v937, %v943
        %v946 = vld [vmem:[%s6] sm:$0x1]
        %v948 = vlaneseq
        %v949 = vshrl.u32 %v948, 7
        %v950 = vsub.s32 0, %v949
        %v951 = vrot.slane %v946, %v950
        %v953 = vadd.f32 %v945, %v951
        %954 = vst.msk [vmem:[%s322] sm:$0xff] %vm349, %v953
        %s955 = sand.u32 %s185, 1
        %s956 = scalar_lea.sflag [#allocation4], %s955
        %s957 = sand.u32 %s185, 1
        %s958 = smul.addr %s957, 8
        %s959 = scalar_lea.vmem [#allocation8], %s958
        // Predicated region
        $region61: #{tpu_custom_call.1} parent=47 // pred_check
          %p960 = pneg %p195
        $region62: #{tpu_custom_call.1} parent=47 // pred_check_branch
          %962 = sbr.rel (%p960) target = $region64
        $region63: #{tpu_custom_call.1} parent=47 // pred_region
          %s964 = ssub.s32 128, 128
          %965 = vsyncadd %s956, %s964
          %s966 = smul.addr %s25, 128
          %s967 = scalar_lea.hbm %s7, %s966
          %s969 = sshll.u32 %s959, 4
          %s970 = int_to_ptr.vmem [resolvable:$true] %s969
          %972 = dma.vmem_to_hbm [thread:$0]  %s970, 128, %s967, %s956
        $region64: #{tpu_custom_call.1} parent=47 // pred_fallthru
          _
      $region48: #{tpu_custom_call.1} parent=5 // pred_fallthru
        _
      %p973 = scmp.le.s32.totalorder 2, %s20
      // Predicated region
      $region65: #{tpu_custom_call.1} parent=5 // pred_check
        %p974 = pneg %p973
      $region66: #{tpu_custom_call.1} parent=5 // pred_check_branch
        %976 = sbr.rel (%p974) target = $region68
      $region67: #{tpu_custom_call.1} parent=5 // pred_region
        %s977 = ssub.s32 %s20, 2
        // Predicated region
        $region69: #{tpu_custom_call.1} parent=67 // pred_check
          %p978 = pneg %p201
        $region70: #{tpu_custom_call.1} parent=67 // pred_check_branch
          %980 = sbr.rel (%p978) target = $region72
        $region71: #{tpu_custom_call.1} parent=67 // pred_region
          %s981 = sand.u32 %s186, 1
          %s982 = scalar_lea.sflag [#allocation4], %s981
          %s983 = sand.u32 %s186, 1
          %s984 = smul.addr %s983, 8
          %s985 = scalar_lea.vmem [#allocation8], %s984
          %986 = dma.done %s982, 128
        $region72: #{tpu_custom_call.1} parent=67 // pred_fallthru
          _
      $region68: #{tpu_custom_call.1} parent=5 // pred_fallthru
        _
    $region6: #{tpu_custom_call.1} parent=1 // loop_footer
      %s24 = sadd.s32 1, %s20
    $region7: #{tpu_custom_call.1} parent=1 // loop_footer_branch
      %19 = sbr.rel target = $region3
    $region8: #{tpu_custom_call.1} parent=1 // loop_exit
      _
    %987 = vsyncpa [#allocation3], 1
    %s988 = scalar_lea.sflag [#allocation3], 1
    %989 = vsyncpa %s988, 1
    %990 = vsyncpa [#allocation6], 1
    %991 = vsyncpa [#allocation4], 1
    %s992 = scalar_lea.sflag [#allocation4], 1
    %993 = vsyncpa %s992, 1

</llo_original>
